<compile_context>
chip_gen: v7x
topology: tpu7x:2x2x1
jax: 0.10.0
libtpu: 0.0.40
codegen_flags: <defaults>
</compile_context>

<pallas_src>
import functools

import jax
import jax.numpy as jnp
from jax.experimental import pallas as pl
from jax.experimental.pallas import tpu as pltpu

_LANES = 128


def _round_up(x, m):
    return ((x + m - 1) // m) * m


def _multi_head_kernel(*refs, n_heads, hw, tile_hw, tiles_per_p, lanes=_LANES):
    x_refs = refs[:n_heads]                    # each (1, C, T) logits
    t_ref = refs[n_heads]                      # (1, 1, T) int32 labels
    inter_ref, psum_ref, bce_ref, ycnt_ref = refs[n_heads + 1:n_heads + 5]

    p_id = pl.program_id(0)       # parallel shard (v7x megacore)
    b_id = pl.program_id(1)       # batch item
    i_id = pl.program_id(2)       # pixel tile within shard

    @pl.when(jnp.logical_and(b_id == 0, i_id == 0))
    def _init():
        inter_ref[...] = jnp.zeros_like(inter_ref)
        psum_ref[...] = jnp.zeros_like(psum_ref)
        bce_ref[...] = jnp.zeros_like(bce_ref)
        ycnt_ref[...] = jnp.zeros_like(ycnt_ref)

    C = x_refs[0].shape[1]
    T = tile_hw
    t = t_ref[0]                                  # (1, T) int32

    # validity mask for ragged H*W (last tile may run past the array; Pallas
    # pads the out-of-range part of the block with unspecified values)
    col = ((p_id * tiles_per_p + i_id) * tile_hw
           + jax.lax.broadcasted_iota(jnp.int32, (1, T), 1))
    valid = col < hw                              # (1, T) bool

    # one-hot target built in-kernel (class id along the sublane axis);
    # shared by every head.
    cls_ids = jax.lax.broadcasted_iota(jnp.int32, (C, T), 0)
    y = jnp.logical_and(cls_ids == t, valid).astype(jnp.float32)

    def lane_fold(a):                             # (C, T) -> (C, lanes): VPU adds
        acc = a[:, 0:lanes]
        for j in range(1, T // lanes):
            acc = acc + a[:, j * lanes:(j + 1) * lanes]
        return acc

    ycnt_ref[0] += lane_fold(y)                   # target counts: head-independent

    for a, x_ref in enumerate(x_refs):
        x = x_ref[0].astype(jnp.float32)          # (C, T) logits, cast in VMEM

        # softmax over the class (sublane) axis; one approx reciprocal / pixel.
        m = jnp.max(x, axis=0, keepdims=True)     # (1, T)
        e = jnp.exp(x - m)                        # (C, T) — shared exp
        denom = jnp.sum(e, axis=0, keepdims=True)
        prob = e * pl.reciprocal(denom, approx=True)
        prob = jnp.where(valid, prob, 0.0)        # select: garbage can't leak
        inter_el = prob * y

        # BCE-with-logits element: softplus(x) - x*y, with softplus reusing the
        # softmax exp:  softplus(x) = m + log(exp(-m) + exp(x - m)).
        # Fall back to relu(x) if the log argument underflows (huge |logits|).
        arg = jnp.exp(-m) + e                     # exp(-m): one EUP op per pixel
        softplus = m + jnp.log(arg)
        softplus = jnp.where(arg < 1e-30, jnp.maximum(x, 0.0), softplus)
        bce_el = jnp.where(valid, softplus - x * y, 0.0)

        inter_ref[0, a] += lane_fold(inter_el)
        psum_ref[0, a] += lane_fold(prob)
        bce_ref[0, a] += lane_fold(bce_el)


def _iou_bce_sums(x_heads, t_b1n, *, tile_hw, num_parallel):
    """Lane-wide partial sums: inter/psum/bce (P,A,C,128) and ycnt (P,C,128)."""
    A = len(x_heads)
    B, C, HW = x_heads[0].shape
    tile_hw = max(_LANES, min(_round_up(tile_hw, _LANES), _round_up(HW, _LANES)))
    n_tiles = pl.cdiv(HW, tile_hw)
    P = num_parallel if (num_parallel > 1 and n_tiles % num_parallel == 0) else 1
    tiles_per_p = n_tiles // P

    kernel = functools.partial(_multi_head_kernel, n_heads=A, hw=HW,
                               tile_hw=tile_hw, tiles_per_p=tiles_per_p)

    tile_map = lambda p, b, i: (b, 0, p * tiles_per_p + i)
    head_acc_spec = pl.BlockSpec((1, A, C, _LANES), lambda p, b, i: (p, 0, 0, 0))
    ycnt_spec = pl.BlockSpec((1, C, _LANES), lambda p, b, i: (p, 0, 0))

    return pl.pallas_call(
        kernel,
        out_shape=(jax.ShapeDtypeStruct((P, A, C, _LANES), jnp.float32),) * 3
        + (jax.ShapeDtypeStruct((P, C, _LANES), jnp.float32),),
        grid_spec=pltpu.PrefetchScalarGridSpec(
            num_scalar_prefetch=0,
            grid=(P, B, tiles_per_p),
            in_specs=[pl.BlockSpec((1, C, tile_hw), tile_map) for _ in range(A)]
            + [pl.BlockSpec((1, 1, tile_hw), tile_map)],
            out_specs=(head_acc_spec, head_acc_spec, head_acc_spec, ycnt_spec),
        ),
        compiler_params=pltpu.CompilerParams(
            dimension_semantics=("parallel", "arbitrary", "arbitrary")),
    )(*x_heads, t_b1n)


def multi_iou_bce(preds, target, *, aux_weights=(1.0, 0.4), alpha=0.25,
                  eps=1e-7, log_loss=True, tile_hw=8192, num_parallel=2):
    """MultiIoUBCE.forward (use_ce=False path), all heads fused into one call."""
    # TODO(synk): use_ce=True branch (weighted cross-entropy) not implemented;
    # module default is use_ce=False.
    preds = tuple(preds)
    if aux_weights is None:
        aux_weights = (1.0,) * len(preds)
    assert len(aux_weights) == len(preds)

    if len({p.shape for p in preds}) != 1:
        # Module asserts every head matches the one-hot target shape, so this
        # path is never hit in practice; handle it by per-head calls anyway.
        total = jnp.float32(0.0)
        for w, p in zip(aux_weights, preds):
            total = total + w * multi_iou_bce(
                (p,), target, aux_weights=(1.0,), alpha=alpha, eps=eps,
                log_loss=log_loss, tile_hw=tile_hw, num_parallel=num_parallel)
        return total

    B, C, H, W = preds[0].shape
    HW = H * W
    x_heads = [p.reshape(B, C, HW) for p in preds]          # free reshape
    t = target.astype(jnp.int32).reshape(B, 1, HW)

    inter_acc, psum_acc, bce_acc, ycnt_acc = _iou_bce_sums(
        x_heads, t, tile_hw=tile_hw, num_parallel=num_parallel)

    # tiny epilogue reduce over parallel shards and lane partials
    inter = jnp.sum(inter_acc, axis=(0, 3))                 # (A, C)
    psum = jnp.sum(psum_acc, axis=(0, 3))                   # (A, C)
    bce = jnp.sum(bce_acc, axis=(0, 2, 3)) / (B * C * HW)   # (A,) mean over elems
    ycnt = jnp.sum(ycnt_acc, axis=(0, 2))                   # (C,)

    union = psum + ycnt[None, :] - inter                    # cardinality - inter
    iou = inter / jnp.maximum(union, eps)                   # smooth=0, clamp_min
    if log_loss:
        iou_loss = -jnp.log(jnp.maximum(iou, eps))
    else:
        iou_loss = 1.0 - iou
    mask = (ycnt > 0.0).astype(jnp.float32)
    iou_loss = jnp.mean(iou_loss * mask[None, :], axis=1)   # (A,)

    per_head = alpha * bce + (1.0 - alpha) * iou_loss       # (A,)
    w = jnp.asarray(aux_weights, dtype=jnp.float32)
    return jnp.sum(w * per_head)


def iou_bce_loss(pred_nchw, target_bhw, **kwargs):
    """Single-head IoUBCE.forward (use_ce=False path)."""
    return multi_iou_bce((pred_nchw,), target_bhw, aux_weights=(1.0,), **kwargs)


# ------------------------- pure-JAX reference (sanity check) ------------------
def _ref_multi_iou_bce(preds, target, n_cls, aux_weights=(1.0, 0.4),
                       alpha=0.25, eps=1e-7):
    total = 0.0
    for w, x in zip(aux_weights, preds):
        x = x.astype(jnp.float32)
        y = jnp.transpose(jax.nn.one_hot(target, n_cls, dtype=jnp.float32),
                          (0, 3, 1, 2))
        bce = jnp.mean(jnp.maximum(x, 0.0) - x * y
                       + jnp.log1p(jnp.exp(-jnp.abs(x))))
        prob = jax.nn.softmax(x, axis=1)
        inter = jnp.sum(prob * y, axis=(0, 2, 3))
        card = jnp.sum(prob + y, axis=(0, 2, 3))
        iou = inter / jnp.maximum(card - inter, eps)
        iou_loss = -jnp.log(jnp.maximum(iou, eps))
        mask = (jnp.sum(y, axis=(0, 2, 3)) > 0.0).astype(jnp.float32)
        iou_loss = jnp.mean(iou_loss * mask)
        total = total + w * (alpha * bce + (1.0 - alpha) * iou_loss)
    return total


if __name__ == "__main__":
    key = jax.random.PRNGKey(0)
    B, C, H, W = 2, 7, 16, 16                  # n_cls = 7
    k1, k2, k3, k4 = jax.random.split(key, 4)
    pred0 = jax.random.normal(k1, (B, C, H, W), dtype=jnp.float32)
    pred1 = jax.random.normal(k2, (B, C, H, W), dtype=jnp.float32)
    target = jax.random.randint(k3, (B, H, W), 0, C, dtype=jnp.int32)

    loss = jax.block_until_ready(multi_iou_bce((pred0, pred1), target,
                                               aux_weights=(1.0, 0.4)))
    ref = _ref_multi_iou_bce((pred0, pred1), target, C, aux_weights=(1.0, 0.4))
    tol = 5e-3 * jnp.maximum(1.0, jnp.abs(ref))   # approx-reciprocal softmax slack
    assert jnp.abs(loss - ref) < tol, (loss, ref)

    # exercise multi-tile accumulation + parallel-shard path at small size
    loss2 = jax.block_until_ready(multi_iou_bce((pred0, pred1), target,
                                                aux_weights=(1.0, 0.4),
                                                tile_hw=128, num_parallel=2))
    assert jnp.abs(loss2 - ref) < tol, (loss2, ref)

    # ragged path, single partial tile (H*W = 100 not a multiple of 128)
    Hr, Wr = 10, 10
    pred_r = jax.random.normal(k4, (B, C, Hr, Wr), dtype=jnp.float32)
    target_r = jax.random.randint(k3, (B, Hr, Wr), 0, C, dtype=jnp.int32)
    loss_r = jax.block_until_ready(
        multi_iou_bce((pred_r,), target_r, aux_weights=(1.0,)))
    ref_r = _ref_multi_iou_bce((pred_r,), target_r, C, aux_weights=(1.0,))
    assert jnp.abs(loss_r - ref_r) < 5e-3 * jnp.maximum(1.0, jnp.abs(ref_r)), (
        loss_r, ref_r)

    # ragged path across multiple tiles (H*W = 130, tile_hw=128 -> 2 tiles,
    # second tile only partially valid) with parallel shards enabled
    Hm, Wm = 10, 13
    pred_m = jax.random.normal(k1, (B, C, Hm, Wm), dtype=jnp.float32)
    target_m = jax.random.randint(k2, (B, Hm, Wm), 0, C, dtype=jnp.int32)
    loss_m = jax.block_until_ready(
        multi_iou_bce((pred_m,), target_m, aux_weights=(1.0,),
                      tile_hw=128, num_parallel=2))
    ref_m = _ref_multi_iou_bce((pred_m,), target_m, C, aux_weights=(1.0,))
    assert jnp.abs(loss_m - ref_m) < 5e-3 * jnp.maximum(1.0, jnp.abs(ref_m)), (
        loss_m, ref_m)

    print("KERNEL_OK")
</pallas_src>

<mosaic_0001>
module attributes {stable_mosaic.version = 11 : i64} {
  func.func @_multi_head_kernel(%arg0: i32, %arg1: i32, %arg2: i32, %arg3: memref<1x7x256xf32, #tpu.memory_space<vmem>>, %arg4: memref<1x7x256xf32, #tpu.memory_space<vmem>>, %arg5: memref<1x1x256xi32, #tpu.memory_space<vmem>>, %arg6: memref<1x2x7x128xf32, #tpu.memory_space<vmem>>, %arg7: memref<1x2x7x128xf32, #tpu.memory_space<vmem>>, %arg8: memref<1x2x7x128xf32, #tpu.memory_space<vmem>>, %arg9: memref<1x7x128xf32, #tpu.memory_space<vmem>>) attributes {dimension_semantics = [#tpu.dimension_semantics<parallel>, #tpu.dimension_semantics<arbitrary>, #tpu.dimension_semantics<arbitrary>], iteration_bounds = array<i64: 1, 2, 1>, scalar_prefetch = 0 : i64, scratch_operands = 0 : i64, tpu.core_type = #tpu.core_type<tc>, window_params = [{transform_indices = @transform_0, window_bounds = array<i64: 1, 7, 256>}, {transform_indices = @transform_1, window_bounds = array<i64: 1, 7, 256>}, {transform_indices = @transform_2, window_bounds = array<i64: 1, 1, 256>}, {transform_indices = @transform_3, window_bounds = array<i64: 1, 2, 7, 128>}, {transform_indices = @transform_4, window_bounds = array<i64: 1, 2, 7, 128>}, {transform_indices = @transform_5, window_bounds = array<i64: 1, 2, 7, 128>}, {transform_indices = @transform_6, window_bounds = array<i64: 1, 7, 128>}]} {
    %c0_i32 = arith.constant 0 : i32
    %0 = arith.cmpi eq, %arg1, %c0_i32 : i32
    %c0_i32_0 = arith.constant 0 : i32
    %1 = arith.cmpi eq, %arg2, %c0_i32_0 : i32
    %2 = arith.andi %0, %1 : i1
    %3 = arith.extui %2 : i1 to i32
    %c0_i32_1 = arith.constant 0 : i32
    %4 = arith.cmpi ne, %3, %c0_i32_1 : i32
    scf.if %4 {
      %cst_77 = arith.constant 0.000000e+00 : f32
      %157 = vector.broadcast %cst_77 : f32 to vector<1x2x7x128xf32>
      %c0_78 = arith.constant 0 : index
      %c0_79 = arith.constant 0 : index
      %c0_80 = arith.constant 0 : index
      %c0_81 = arith.constant 0 : index
      %158 = vector.load %arg6[%c0_78, %c0_79, %c0_80, %c0_81] : memref<1x2x7x128xf32, #tpu.memory_space<vmem>>, vector<1x2x7x128xf32>
      tpu.vector_store %arg6[%c0_78, %c0_79, %c0_80, %c0_81], %157 {strides = array<i32>} : memref<1x2x7x128xf32, #tpu.memory_space<vmem>>, vector<1x2x7x128xf32>,
      %cst_82 = arith.constant 0.000000e+00 : f32
      %159 = vector.broadcast %cst_82 : f32 to vector<1x2x7x128xf32>
      %c0_83 = arith.constant 0 : index
      %c0_84 = arith.constant 0 : index
      %c0_85 = arith.constant 0 : index
      %c0_86 = arith.constant 0 : index
      %160 = vector.load %arg7[%c0_83, %c0_84, %c0_85, %c0_86] : memref<1x2x7x128xf32, #tpu.memory_space<vmem>>, vector<1x2x7x128xf32>
      tpu.vector_store %arg7[%c0_83, %c0_84, %c0_85, %c0_86], %159 {strides = array<i32>} : memref<1x2x7x128xf32, #tpu.memory_space<vmem>>, vector<1x2x7x128xf32>,
      %cst_87 = arith.constant 0.000000e+00 : f32
      %161 = vector.broadcast %cst_87 : f32 to vector<1x2x7x128xf32>
      %c0_88 = arith.constant 0 : index
      %c0_89 = arith.constant 0 : index
      %c0_90 = arith.constant 0 : index
      %c0_91 = arith.constant 0 : index
      %162 = vector.load %arg8[%c0_88, %c0_89, %c0_90, %c0_91] : memref<1x2x7x128xf32, #tpu.memory_space<vmem>>, vector<1x2x7x128xf32>
      tpu.vector_store %arg8[%c0_88, %c0_89, %c0_90, %c0_91], %161 {strides = array<i32>} : memref<1x2x7x128xf32, #tpu.memory_space<vmem>>, vector<1x2x7x128xf32>,
      %cst_92 = arith.constant 0.000000e+00 : f32
      %163 = vector.broadcast %cst_92 : f32 to vector<1x7x128xf32>
      %c0_93 = arith.constant 0 : index
      %c0_94 = arith.constant 0 : index
      %c0_95 = arith.constant 0 : index
      %164 = vector.load %arg9[%c0_93, %c0_94, %c0_95] : memref<1x7x128xf32, #tpu.memory_space<vmem>>, vector<1x7x128xf32>
      tpu.vector_store %arg9[%c0_93, %c0_94, %c0_95], %163 {strides = array<i32>} : memref<1x7x128xf32, #tpu.memory_space<vmem>>, vector<1x7x128xf32>,
    } else {
    }
    %c0 = arith.constant 0 : index
    %c0_2 = arith.constant 0 : index
    %c0_3 = arith.constant 0 : index
    %5 = vector.load %arg5[%c0, %c0_2, %c0_3] : memref<1x1x256xi32, #tpu.memory_space<vmem>>, vector<1x1x256xi32>
    %6 = vector.shape_cast %5 : vector<1x1x256xi32> to vector<1x256xi32>
    %c1_i32 = arith.constant 1 : i32
    %7 = arith.muli %arg0, %c1_i32 : i32
    %8 = arith.addi %7, %arg2 : i32
    %c256_i32 = arith.constant 256 : i32
    %9 = arith.muli %8, %c256_i32 : i32
    %10 = tpu.iota {dimensions = array<i32: 1>} : vector<1x256xi32>
    %11 = vector.broadcast %9 : i32 to vector<1x256xi32>
    %12 = arith.addi %11, %10 : vector<1x256xi32>
    %c256_i32_4 = arith.constant 256 : i32
    %13 = vector.broadcast %c256_i32_4 : i32 to vector<1x256xi32>
    %14 = arith.cmpi slt, %12, %13 : vector<1x256xi32>
    %15 = tpu.iota {dimensions = array<i32: 0>} : vector<7x256xi32>
    %16 = vector.broadcast %6 : vector<1x256xi32> to vector<7x256xi32>
    %17 = arith.cmpi eq, %15, %16 : vector<7x256xi32>
    %18 = vector.broadcast %14 : vector<1x256xi1> to vector<7x256xi1>
    %19 = arith.andi %17, %18 : vector<7x256xi1>
    %20 = arith.extui %19 : vector<7x256xi1> to vector<7x256xi32>
    %21 = arith.sitofp %20 : vector<7x256xi32> to vector<7x256xf32>
    %c0_5 = arith.constant 0 : index
    %c0_6 = arith.constant 0 : index
    %c0_7 = arith.constant 0 : index
    %22 = vector.load %arg9[%c0_5, %c0_6, %c0_7] : memref<1x7x128xf32, #tpu.memory_space<vmem>>, vector<1x7x128xf32>
    %23 = vector.shape_cast %22 : vector<1x7x128xf32> to vector<7x128xf32>
    %24 = vector.extract_strided_slice %21 {offsets = [0, 0], sizes = [7, 128], strides = [1, 1]} : vector<7x256xf32> to vector<7x128xf32>
    %25 = vector.extract_strided_slice %21 {offsets = [0, 128], sizes = [7, 128], strides = [1, 1]} : vector<7x256xf32> to vector<7x128xf32>
    %26 = arith.addf %24, %25 : vector<7x128xf32>
    %27 = arith.addf %23, %26 : vector<7x128xf32>
    %c0_8 = arith.constant 0 : index
    %c0_9 = arith.constant 0 : index
    %c0_10 = arith.constant 0 : index
    %28 = vector.load %arg9[%c0_8, %c0_9, %c0_10] : memref<1x7x128xf32, #tpu.memory_space<vmem>>, vector<1x7x128xf32>
    %29 = vector.shape_cast %28 : vector<1x7x128xf32> to vector<7x128xf32>
    %30 = vector.shape_cast %27 : vector<7x128xf32> to vector<1x7x128xf32>
    tpu.vector_store %arg9[%c0_8, %c0_9, %c0_10], %30 {strides = array<i32>} : memref<1x7x128xf32, #tpu.memory_space<vmem>>, vector<1x7x128xf32>,
    %c0_11 = arith.constant 0 : index
    %c0_12 = arith.constant 0 : index
    %c0_13 = arith.constant 0 : index
    %31 = vector.load %arg3[%c0_11, %c0_12, %c0_13] : memref<1x7x256xf32, #tpu.memory_space<vmem>>, vector<1x7x256xf32>
    %32 = vector.shape_cast %31 : vector<1x7x256xf32> to vector<7x256xf32>
    %cst = arith.constant dense<0xFF800000> : vector<256xf32>
    %33 = vector.multi_reduction <maximumf>, %32, %cst [0] : vector<7x256xf32> to vector<256xf32>
    %34 = vector.shape_cast %33 : vector<256xf32> to vector<1x256xf32>
    %35 = vector.broadcast %34 : vector<1x256xf32> to vector<7x256xf32>
    %36 = arith.subf %32, %35 : vector<7x256xf32>
    %37 = math.exp %36 : vector<7x256xf32>
    %cst_14 = arith.constant dense<0.000000e+00> : vector<256xf32>
    %38 = vector.multi_reduction <add>, %37, %cst_14 [0] : vector<7x256xf32> to vector<256xf32>
    %39 = vector.shape_cast %38 : vector<256xf32> to vector<1x256xf32>
    %40 = tpu.reciprocal %39 {approx = true} : vector<1x256xf32> -> vector<1x256xf32>
    %41 = vector.broadcast %40 : vector<1x256xf32> to vector<7x256xf32>
    %42 = arith.mulf %37, %41 : vector<7x256xf32>
    %cst_15 = arith.constant 0.000000e+00 : f32
    %43 = vector.shape_cast %14 : vector<1x256xi1> to vector<1x256xi1>
    %44 = vector.broadcast %43 : vector<1x256xi1> to vector<7x256xi1>
    %45 = vector.broadcast %cst_15 : f32 to vector<7x256xf32>
    %46 = arith.select %44, %42, %45 : vector<7x256xi1>, vector<7x256xf32>
    %47 = arith.mulf %46, %21 : vector<7x256xf32>
    %cst_16 = arith.constant 0.000000e+00 : f32
    %48 = vector.broadcast %cst_16 : f32 to vector<1x256xf32>
    %49 = arith.subf %48, %34 : vector<1x256xf32>
    %50 = math.exp %49 : vector<1x256xf32>
    %51 = vector.broadcast %50 : vector<1x256xf32> to vector<7x256xf32>
    %52 = arith.addf %51, %37 : vector<7x256xf32>
    %53 = math.log %52 : vector<7x256xf32>
    %54 = vector.broadcast %34 : vector<1x256xf32> to vector<7x256xf32>
    %55 = arith.addf %54, %53 : vector<7x256xf32>
    %cst_17 = arith.constant 1.000000e-30 : f32
    %56 = vector.broadcast %cst_17 : f32 to vector<7x256xf32>
    %57 = arith.cmpf olt, %52, %56 : vector<7x256xf32>
    %cst_18 = arith.constant 0.000000e+00 : f32
    %58 = vector.broadcast %cst_18 : f32 to vector<7x256xf32>
    %59 = arith.maximumf %32, %58 : vector<7x256xf32>
    %60 = arith.select %57, %59, %55 : vector<7x256xi1>, vector<7x256xf32>
    %61 = arith.mulf %32, %21 : vector<7x256xf32>
    %62 = arith.subf %60, %61 : vector<7x256xf32>
    %cst_19 = arith.constant 0.000000e+00 : f32
    %63 = vector.shape_cast %14 : vector<1x256xi1> to vector<1x256xi1>
    %64 = vector.broadcast %63 : vector<1x256xi1> to vector<7x256xi1>
    %65 = vector.broadcast %cst_19 : f32 to vector<7x256xf32>
    %66 = arith.select %64, %62, %65 : vector<7x256xi1>, vector<7x256xf32>
    %c0_20 = arith.constant 0 : index
    %c0_21 = arith.constant 0 : index
    %c0_22 = arith.constant 0 : index
    %c0_23 = arith.constant 0 : index
    %67 = vector.load %arg6[%c0_20, %c0_21, %c0_22, %c0_23] : memref<1x2x7x128xf32, #tpu.memory_space<vmem>>, vector<1x1x7x128xf32>
    %68 = vector.shape_cast %67 : vector<1x1x7x128xf32> to vector<7x128xf32>
    %69 = vector.extract_strided_slice %47 {offsets = [0, 0], sizes = [7, 128], strides = [1, 1]} : vector<7x256xf32> to vector<7x128xf32>
    %70 = vector.extract_strided_slice %47 {offsets = [0, 128], sizes = [7, 128], strides = [1, 1]} : vector<7x256xf32> to vector<7x128xf32>
    %71 = arith.addf %69, %70 : vector<7x128xf32>
    %72 = arith.addf %68, %71 : vector<7x128xf32>
    %c0_24 = arith.constant 0 : index
    %c0_25 = arith.constant 0 : index
    %c0_26 = arith.constant 0 : index
    %c0_27 = arith.constant 0 : index
    %73 = vector.load %arg6[%c0_24, %c0_25, %c0_26, %c0_27] : memref<1x2x7x128xf32, #tpu.memory_space<vmem>>, vector<1x1x7x128xf32>
    %74 = vector.shape_cast %73 : vector<1x1x7x128xf32> to vector<7x128xf32>
    %75 = vector.shape_cast %72 : vector<7x128xf32> to vector<1x1x7x128xf32>
    tpu.vector_store %arg6[%c0_24, %c0_25, %c0_26, %c0_27], %75 {strides = array<i32>} : memref<1x2x7x128xf32, #tpu.memory_space<vmem>>, vector<1x1x7x128xf32>,
    %c0_28 = arith.constant 0 : index
    %c0_29 = arith.constant 0 : index
    %c0_30 = arith.constant 0 : index
    %c0_31 = arith.constant 0 : index
    %76 = vector.load %arg7[%c0_28, %c0_29, %c0_30, %c0_31] : memref<1x2x7x128xf32, #tpu.memory_space<vmem>>, vector<1x1x7x128xf32>
    %77 = vector.shape_cast %76 : vector<1x1x7x128xf32> to vector<7x128xf32>
    %78 = vector.extract_strided_slice %46 {offsets = [0, 0], sizes = [7, 128], strides = [1, 1]} : vector<7x256xf32> to vector<7x128xf32>
    %79 = vector.extract_strided_slice %46 {offsets = [0, 128], sizes = [7, 128], strides = [1, 1]} : vector<7x256xf32> to vector<7x128xf32>
    %80 = arith.addf %78, %79 : vector<7x128xf32>
    %81 = arith.addf %77, %80 : vector<7x128xf32>
    %c0_32 = arith.constant 0 : index
    %c0_33 = arith.constant 0 : index
    %c0_34 = arith.constant 0 : index
    %c0_35 = arith.constant 0 : index
    %82 = vector.load %arg7[%c0_32, %c0_33, %c0_34, %c0_35] : memref<1x2x7x128xf32, #tpu.memory_space<vmem>>, vector<1x1x7x128xf32>
    %83 = vector.shape_cast %82 : vector<1x1x7x128xf32> to vector<7x128xf32>
    %84 = vector.shape_cast %81 : vector<7x128xf32> to vector<1x1x7x128xf32>
    tpu.vector_store %arg7[%c0_32, %c0_33, %c0_34, %c0_35], %84 {strides = array<i32>} : memref<1x2x7x128xf32, #tpu.memory_space<vmem>>, vector<1x1x7x128xf32>,
    %c0_36 = arith.constant 0 : index
    %c0_37 = arith.constant 0 : index
    %c0_38 = arith.constant 0 : index
    %c0_39 = arith.constant 0 : index
    %85 = vector.load %arg8[%c0_36, %c0_37, %c0_38, %c0_39] : memref<1x2x7x128xf32, #tpu.memory_space<vmem>>, vector<1x1x7x128xf32>
    %86 = vector.shape_cast %85 : vector<1x1x7x128xf32> to vector<7x128xf32>
    %87 = vector.extract_strided_slice %66 {offsets = [0, 0], sizes = [7, 128], strides = [1, 1]} : vector<7x256xf32> to vector<7x128xf32>
    %88 = vector.extract_strided_slice %66 {offsets = [0, 128], sizes = [7, 128], strides = [1, 1]} : vector<7x256xf32> to vector<7x128xf32>
    %89 = arith.addf %87, %88 : vector<7x128xf32>
    %90 = arith.addf %86, %89 : vector<7x128xf32>
    %c0_40 = arith.constant 0 : index
    %c0_41 = arith.constant 0 : index
    %c0_42 = arith.constant 0 : index
    %c0_43 = arith.constant 0 : index
    %91 = vector.load %arg8[%c0_40, %c0_41, %c0_42, %c0_43] : memref<1x2x7x128xf32, #tpu.memory_space<vmem>>, vector<1x1x7x128xf32>
    %92 = vector.shape_cast %91 : vector<1x1x7x128xf32> to vector<7x128xf32>
    %93 = vector.shape_cast %90 : vector<7x128xf32> to vector<1x1x7x128xf32>
    tpu.vector_store %arg8[%c0_40, %c0_41, %c0_42, %c0_43], %93 {strides = array<i32>} : memref<1x2x7x128xf32, #tpu.memory_space<vmem>>, vector<1x1x7x128xf32>,
    %c0_44 = arith.constant 0 : index
    %c0_45 = arith.constant 0 : index
    %c0_46 = arith.constant 0 : index
    %94 = vector.load %arg4[%c0_44, %c0_45, %c0_46] : memref<1x7x256xf32, #tpu.memory_space<vmem>>, vector<1x7x256xf32>
    %95 = vector.shape_cast %94 : vector<1x7x256xf32> to vector<7x256xf32>
    %cst_47 = arith.constant dense<0xFF800000> : vector<256xf32>
    %96 = vector.multi_reduction <maximumf>, %95, %cst_47 [0] : vector<7x256xf32> to vector<256xf32>
    %97 = vector.shape_cast %96 : vector<256xf32> to vector<1x256xf32>
    %98 = vector.broadcast %97 : vector<1x256xf32> to vector<7x256xf32>
    %99 = arith.subf %95, %98 : vector<7x256xf32>
    %100 = math.exp %99 : vector<7x256xf32>
    %cst_48 = arith.constant dense<0.000000e+00> : vector<256xf32>
    %101 = vector.multi_reduction <add>, %100, %cst_48 [0] : vector<7x256xf32> to vector<256xf32>
    %102 = vector.shape_cast %101 : vector<256xf32> to vector<1x256xf32>
    %103 = tpu.reciprocal %102 {approx = true} : vector<1x256xf32> -> vector<1x256xf32>
    %104 = vector.broadcast %103 : vector<1x256xf32> to vector<7x256xf32>
    %105 = arith.mulf %100, %104 : vector<7x256xf32>
    %cst_49 = arith.constant 0.000000e+00 : f32
    %106 = vector.shape_cast %14 : vector<1x256xi1> to vector<1x256xi1>
    %107 = vector.broadcast %106 : vector<1x256xi1> to vector<7x256xi1>
    %108 = vector.broadcast %cst_49 : f32 to vector<7x256xf32>
    %109 = arith.select %107, %105, %108 : vector<7x256xi1>, vector<7x256xf32>
    %110 = arith.mulf %109, %21 : vector<7x256xf32>
    %cst_50 = arith.constant 0.000000e+00 : f32
    %111 = vector.broadcast %cst_50 : f32 to vector<1x256xf32>
    %112 = arith.subf %111, %97 : vector<1x256xf32>
    %113 = math.exp %112 : vector<1x256xf32>
    %114 = vector.broadcast %113 : vector<1x256xf32> to vector<7x256xf32>
    %115 = arith.addf %114, %100 : vector<7x256xf32>
    %116 = math.log %115 : vector<7x256xf32>
    %117 = vector.broadcast %97 : vector<1x256xf32> to vector<7x256xf32>
    %118 = arith.addf %117, %116 : vector<7x256xf32>
    %cst_51 = arith.constant 1.000000e-30 : f32
    %119 = vector.broadcast %cst_51 : f32 to vector<7x256xf32>
    %120 = arith.cmpf olt, %115, %119 : vector<7x256xf32>
    %cst_52 = arith.constant 0.000000e+00 : f32
    %121 = vector.broadcast %cst_52 : f32 to vector<7x256xf32>
    %122 = arith.maximumf %95, %121 : vector<7x256xf32>
    %123 = arith.select %120, %122, %118 : vector<7x256xi1>, vector<7x256xf32>
    %124 = arith.mulf %95, %21 : vector<7x256xf32>
    %125 = arith.subf %123, %124 : vector<7x256xf32>
    %cst_53 = arith.constant 0.000000e+00 : f32
    %126 = vector.shape_cast %14 : vector<1x256xi1> to vector<1x256xi1>
    %127 = vector.broadcast %126 : vector<1x256xi1> to vector<7x256xi1>
    %128 = vector.broadcast %cst_53 : f32 to vector<7x256xf32>
    %129 = arith.select %127, %125, %128 : vector<7x256xi1>, vector<7x256xf32>
    %c0_54 = arith.constant 0 : index
    %c1 = arith.constant 1 : index
    %c0_55 = arith.constant 0 : index
    %c0_56 = arith.constant 0 : index
    %130 = vector.load %arg6[%c0_54, %c1, %c0_55, %c0_56] : memref<1x2x7x128xf32, #tpu.memory_space<vmem>>, vector<1x1x7x128xf32>
    %131 = vector.shape_cast %130 : vector<1x1x7x128xf32> to vector<7x128xf32>
    %132 = vector.extract_strided_slice %110 {offsets = [0, 0], sizes = [7, 128], strides = [1, 1]} : vector<7x256xf32> to vector<7x128xf32>
    %133 = vector.extract_strided_slice %110 {offsets = [0, 128], sizes = [7, 128], strides = [1, 1]} : vector<7x256xf32> to vector<7x128xf32>
    %134 = arith.addf %132, %133 : vector<7x128xf32>
    %135 = arith.addf %131, %134 : vector<7x128xf32>
    %c0_57 = arith.constant 0 : index
    %c1_58 = arith.constant 1 : index
    %c0_59 = arith.constant 0 : index
    %c0_60 = arith.constant 0 : index
    %136 = vector.load %arg6[%c0_57, %c1_58, %c0_59, %c0_60] : memref<1x2x7x128xf32, #tpu.memory_space<vmem>>, vector<1x1x7x128xf32>
    %137 = vector.shape_cast %136 : vector<1x1x7x128xf32> to vector<7x128xf32>
    %138 = vector.shape_cast %135 : vector<7x128xf32> to vector<1x1x7x128xf32>
    tpu.vector_store %arg6[%c0_57, %c1_58, %c0_59, %c0_60], %138 {strides = array<i32>} : memref<1x2x7x128xf32, #tpu.memory_space<vmem>>, vector<1x1x7x128xf32>,
    %c0_61 = arith.constant 0 : index
    %c1_62 = arith.constant 1 : index
    %c0_63 = arith.constant 0 : index
    %c0_64 = arith.constant 0 : index
    %139 = vector.load %arg7[%c0_61, %c1_62, %c0_63, %c0_64] : memref<1x2x7x128xf32, #tpu.memory_space<vmem>>, vector<1x1x7x128xf32>
    %140 = vector.shape_cast %139 : vector<1x1x7x128xf32> to vector<7x128xf32>
    %141 = vector.extract_strided_slice %109 {offsets = [0, 0], sizes = [7, 128], strides = [1, 1]} : vector<7x256xf32> to vector<7x128xf32>
    %142 = vector.extract_strided_slice %109 {offsets = [0, 128], sizes = [7, 128], strides = [1, 1]} : vector<7x256xf32> to vector<7x128xf32>
    %143 = arith.addf %141, %142 : vector<7x128xf32>
    %144 = arith.addf %140, %143 : vector<7x128xf32>
    %c0_65 = arith.constant 0 : index
    %c1_66 = arith.constant 1 : index
    %c0_67 = arith.constant 0 : index
    %c0_68 = arith.constant 0 : index
    %145 = vector.load %arg7[%c0_65, %c1_66, %c0_67, %c0_68] : memref<1x2x7x128xf32, #tpu.memory_space<vmem>>, vector<1x1x7x128xf32>
    %146 = vector.shape_cast %145 : vector<1x1x7x128xf32> to vector<7x128xf32>
    %147 = vector.shape_cast %144 : vector<7x128xf32> to vector<1x1x7x128xf32>
    tpu.vector_store %arg7[%c0_65, %c1_66, %c0_67, %c0_68], %147 {strides = array<i32>} : memref<1x2x7x128xf32, #tpu.memory_space<vmem>>, vector<1x1x7x128xf32>,
    %c0_69 = arith.constant 0 : index
    %c1_70 = arith.constant 1 : index
    %c0_71 = arith.constant 0 : index
    %c0_72 = arith.constant 0 : index
    %148 = vector.load %arg8[%c0_69, %c1_70, %c0_71, %c0_72] : memref<1x2x7x128xf32, #tpu.memory_space<vmem>>, vector<1x1x7x128xf32>
    %149 = vector.shape_cast %148 : vector<1x1x7x128xf32> to vector<7x128xf32>
    %150 = vector.extract_strided_slice %129 {offsets = [0, 0], sizes = [7, 128], strides = [1, 1]} : vector<7x256xf32> to vector<7x128xf32>
    %151 = vector.extract_strided_slice %129 {offsets = [0, 128], sizes = [7, 128], strides = [1, 1]} : vector<7x256xf32> to vector<7x128xf32>
    %152 = arith.addf %150, %151 : vector<7x128xf32>
    %153 = arith.addf %149, %152 : vector<7x128xf32>
    %c0_73 = arith.constant 0 : index
    %c1_74 = arith.constant 1 : index
    %c0_75 = arith.constant 0 : index
    %c0_76 = arith.constant 0 : index
    %154 = vector.load %arg8[%c0_73, %c1_74, %c0_75, %c0_76] : memref<1x2x7x128xf32, #tpu.memory_space<vmem>>, vector<1x1x7x128xf32>
    %155 = vector.shape_cast %154 : vector<1x1x7x128xf32> to vector<7x128xf32>
    %156 = vector.shape_cast %153 : vector<7x128xf32> to vector<1x1x7x128xf32>
    tpu.vector_store %arg8[%c0_73, %c1_74, %c0_75, %c0_76], %156 {strides = array<i32>} : memref<1x2x7x128xf32, #tpu.memory_space<vmem>>, vector<1x1x7x128xf32>,
    return
  }
  func.func @transform_0(%arg0: i32, %arg1: i32, %arg2: i32) -> (i32, i32, i32) {
    %c1_i32 = arith.constant 1 : i32
    %0 = arith.muli %arg0, %c1_i32 : i32
    %1 = arith.addi %0, %arg2 : i32
    %c0_i32 = arith.constant 0 : i32
    %c0_i32_0 = arith.constant 0 : i32
    return %arg1, %c0_i32, %1 : i32, i32, i32
  }
  func.func @transform_1(%arg0: i32, %arg1: i32, %arg2: i32) -> (i32, i32, i32) {
    %c1_i32 = arith.constant 1 : i32
    %0 = arith.muli %arg0, %c1_i32 : i32
    %1 = arith.addi %0, %arg2 : i32
    %c0_i32 = arith.constant 0 : i32
    %c0_i32_0 = arith.constant 0 : i32
    return %arg1, %c0_i32, %1 : i32, i32, i32
  }
  func.func @transform_2(%arg0: i32, %arg1: i32, %arg2: i32) -> (i32, i32, i32) {
    %c1_i32 = arith.constant 1 : i32
    %0 = arith.muli %arg0, %c1_i32 : i32
    %1 = arith.addi %0, %arg2 : i32
    %c0_i32 = arith.constant 0 : i32
    %c0_i32_0 = arith.constant 0 : i32
    return %arg1, %c0_i32, %1 : i32, i32, i32
  }
  func.func @transform_3(%arg0: i32, %arg1: i32, %arg2: i32) -> (i32, i32, i32, i32) {
    %c0_i32 = arith.constant 0 : i32
    %c0_i32_0 = arith.constant 0 : i32
    %c0_i32_1 = arith.constant 0 : i32
    %c0_i32_2 = arith.constant 0 : i32
    return %arg0, %c0_i32, %c0_i32_0, %c0_i32_1 : i32, i32, i32, i32
  }
  func.func @transform_4(%arg0: i32, %arg1: i32, %arg2: i32) -> (i32, i32, i32, i32) {
    %c0_i32 = arith.constant 0 : i32
    %c0_i32_0 = arith.constant 0 : i32
    %c0_i32_1 = arith.constant 0 : i32
    %c0_i32_2 = arith.constant 0 : i32
    return %arg0, %c0_i32, %c0_i32_0, %c0_i32_1 : i32, i32, i32, i32
  }
  func.func @transform_5(%arg0: i32, %arg1: i32, %arg2: i32) -> (i32, i32, i32, i32) {
    %c0_i32 = arith.constant 0 : i32
    %c0_i32_0 = arith.constant 0 : i32
    %c0_i32_1 = arith.constant 0 : i32
    %c0_i32_2 = arith.constant 0 : i32
    return %arg0, %c0_i32, %c0_i32_0, %c0_i32_1 : i32, i32, i32, i32
  }
  func.func @transform_6(%arg0: i32, %arg1: i32, %arg2: i32) -> (i32, i32, i32) {
    %c0_i32 = arith.constant 0 : i32
    %c0_i32_0 = arith.constant 0 : i32
    %c0_i32_1 = arith.constant 0 : i32
    return %arg0, %c0_i32, %c0_i32_0 : i32, i32, i32
  }
}

</mosaic_0001>

<llo_original>
// kernel: tpu_custom_call.1
$region0: #{tpu_custom_call.1}
  #allocation0 [shape = 'u32[]', space=smem, size = 0x4, offset = 0x4, fixed_abs, tag = 'smem constant byte address 0x4 - core index']
  #allocation1 [shape = 'u32[144,128]{1,0:T(1,128)}', space=vmem, size = 0x12000, scoped, tag = 'internal scratch']
  %s0 = inlined_call_operand.vmem [shape: f32[2,7,256], index: 0, kind: input, shape index: {}]
  %s1 = inlined_call_operand.vmem [shape: f32[2,7,256], index: 1, kind: input, shape index: {}]
  %s2 = inlined_call_operand.vmem [shape: s32[2,1,256], index: 2, kind: input, shape index: {}]
  %s3 = inlined_call_operand.vmem [shape: f32[1,2,7,128], index: 3, kind: output, shape index: {0}]
  %s4 = inlined_call_operand.vmem [shape: f32[1,2,7,128], index: 4, kind: output, shape index: {1}]
  %s5 = inlined_call_operand.vmem [shape: f32[1,2,7,128], index: 5, kind: output, shape index: {2}]
  %s6 = inlined_call_operand.vmem [shape: f32[1,7,128], index: 6, kind: output, shape index: {3}]
  %7 = xla_tuple %s3, %s4, %s5, %s6
  %s8 = sld [smem:[#allocation0]]
  $region73: #{tpu_custom_call.1} parent=0
    _
  %s10 = ssub.s32 1, %s8
  %s11 = scalar_select 0, %s10, %s8
  loop: start=0, step=1, limit=4
  $region2: #{tpu_custom_call.1} parent=0 // loop_pre_header
    _
  $region3: #{tpu_custom_call.1} parent=0 // loop_header
    %s13 = sphi 0, %s17
    %p14 = scmp.ge.s32.totalorder %s13, 4
    %s20 = sphi 0, %s39
    %s21 = sphi 0, %s35
    %s22 = sphi 0, %s31
    %s23 = sphi 0, %s20
    %s24 = sphi 0, %s21
    %s25 = sphi 0, %s22
    %s26 = sphi 0, %s23
    %s27 = sphi 0, %s24
    %s28 = sphi 0, %s25
    %s46 = sphi 0, %s48
    %s49 = sphi 0, %s46
    %s50 = sphi 0, %s49
    %s66 = sphi 0, %s50
    %s76 = sphi 0, %s78
    %s79 = sphi 0, %s76
    %s80 = sphi 0, %s79
    %s96 = sphi 0, %s80
    %s106 = sphi 0, %s108
    %s109 = sphi 0, %s106
    %s110 = sphi 0, %s109
    %s126 = sphi 0, %s110
    %s132 = sphi 0, %s134
    %s135 = sphi 0, %s132
    %s136 = sphi 0, %s135
    %s152 = sphi 0, %s136
    %s158 = sphi 0, %s160
    %s161 = sphi 0, %s158
    %s162 = sphi 0, %s161
    %s178 = sphi 0, %s162
    %s184 = sphi 0, %s186
    %s187 = sphi 0, %s184
    %s188 = sphi 0, %s187
    %s204 = sphi 0, %s188
    %s210 = sphi 0, %s212
    %s213 = sphi 0, %s210
    %s214 = sphi 0, %s213
    %s230 = sphi 0, %s214
  $region4: #{tpu_custom_call.1} parent=0 // loop_header_branch
    %16 = sbr.rel (%p14) target = $region8
  $region5: #{tpu_custom_call.1} parent=0 // loop_body
    %s18 = ssub.s32 %s13, 1
    %s19 = ssub.s32 %s13, 2
    %s29 = sadd.s32 1, %s22
    %p30 = scmp.ge.s32.totalorder %s29, 1
    %s31 = scalar_select %p30, 0, %s29
    %s32 = sadd.s32 1, %s21
    %s33 = scalar_select %p30, %s32, %s21
    %p34 = scmp.ge.s32.totalorder %s33, 2
    %s35 = scalar_select %p34, 0, %s33
    %s36 = sadd.s32 1, %s20
    %s37 = scalar_select %p34, %s36, %s20
    %p38 = scmp.ge.s32.totalorder %s37, 1
    %s39 = scalar_select %p38, 0, %s37
    %s40 = sadd.s32 %s20, %s22
    %s41 = sadd.s32 %s39, %s31
    %s42 = ssub.s32 %s21, %s35
    %s43 = ssub.s32 %s40, %s41
    %s44 = sor.u32 %s42, %s43
    %p45 = scmp.eq.s32.totalorder %s44, 0
    %s47 = sadd.s32 %s46, 1
    %s48 = scalar_select %p45, %s46, %s47
    %p51 = pneg %p45
    %p52 = scmp.eq.s32.totalorder %s13, 1
    %p53 = por %p51, %p52
    %p54 = scmp.ne.s32.totalorder %s46, %s49
    %p55 = scmp.eq.s32.totalorder %s13, 0
    %p56 = por %p54, %p55
    %p57 = scmp.ne.s32.totalorder %s46, %s49
    %p58 = scmp.eq.s32.totalorder %s18, 1
    %p59 = por %p57, %p58
    %p60 = scmp.ne.s32.totalorder %s49, %s50
    %p61 = scmp.eq.s32.totalorder %s18, 0
    %p62 = por %p60, %p61
    %p63 = scmp.ne.s32.totalorder %s49, %s50
    %p64 = scmp.eq.s32.totalorder %s19, 1
    %p65 = por %p63, %p64
    %p67 = scmp.ne.s32.totalorder %s50, %s66
    %p68 = scmp.eq.s32.totalorder %s19, 0
    %p69 = por %p67, %p68
    %s70 = sadd.s32 %s20, %s22
    %s71 = sadd.s32 %s39, %s31
    %s72 = ssub.s32 %s21, %s35
    %s73 = ssub.s32 %s70, %s71
    %s74 = sor.u32 %s72, %s73
    %p75 = scmp.eq.s32.totalorder %s74, 0
    %s77 = sadd.s32 %s76, 1
    %s78 = scalar_select %p75, %s76, %s77
    %p81 = pneg %p75
    %p82 = scmp.eq.s32.totalorder %s13, 1
    %p83 = por %p81, %p82
    %p84 = scmp.ne.s32.totalorder %s76, %s79
    %p85 = scmp.eq.s32.totalorder %s13, 0
    %p86 = por %p84, %p85
    %p87 = scmp.ne.s32.totalorder %s76, %s79
    %p88 = scmp.eq.s32.totalorder %s18, 1
    %p89 = por %p87, %p88
    %p90 = scmp.ne.s32.totalorder %s79, %s80
    %p91 = scmp.eq.s32.totalorder %s18, 0
    %p92 = por %p90, %p91
    %p93 = scmp.ne.s32.totalorder %s79, %s80
    %p94 = scmp.eq.s32.totalorder %s19, 1
    %p95 = por %p93, %p94
    %p97 = scmp.ne.s32.totalorder %s80, %s96
    %p98 = scmp.eq.s32.totalorder %s19, 0
    %p99 = por %p97, %p98
    %s100 = sadd.s32 %s20, %s22
    %s101 = sadd.s32 %s39, %s31
    %s102 = ssub.s32 %s21, %s35
    %s103 = ssub.s32 %s100, %s101
    %s104 = sor.u32 %s102, %s103
    %p105 = scmp.eq.s32.totalorder %s104, 0
    %s107 = sadd.s32 %s106, 1
    %s108 = scalar_select %p105, %s106, %s107
    %p111 = pneg %p105
    %p112 = scmp.eq.s32.totalorder %s13, 1
    %p113 = por %p111, %p112
    %p114 = scmp.ne.s32.totalorder %s106, %s109
    %p115 = scmp.eq.s32.totalorder %s13, 0
    %p116 = por %p114, %p115
    %p117 = scmp.ne.s32.totalorder %s106, %s109
    %p118 = scmp.eq.s32.totalorder %s18, 1
    %p119 = por %p117, %p118
    %p120 = scmp.ne.s32.totalorder %s109, %s110
    %p121 = scmp.eq.s32.totalorder %s18, 0
    %p122 = por %p120, %p121
    %p123 = scmp.ne.s32.totalorder %s109, %s110
    %p124 = scmp.eq.s32.totalorder %s19, 1
    %p125 = por %p123, %p124
    %p127 = scmp.ne.s32.totalorder %s110, %s126
    %p128 = scmp.eq.s32.totalorder %s19, 0
    %p129 = por %p127, %p128
    %s130 = ssub.s32 %s20, %s39
    %p131 = scmp.eq.s32.totalorder %s130, 0
    %s133 = sadd.s32 %s132, 1
    %s134 = scalar_select %p131, %s132, %s133
    %p137 = pneg %p131
    %p138 = scmp.eq.s32.totalorder %s13, 1
    %p139 = por %p137, %p138
    %p140 = scmp.ne.s32.totalorder %s132, %s135
    %p141 = scmp.eq.s32.totalorder %s13, 0
    %p142 = por %p140, %p141
    %p143 = scmp.ne.s32.totalorder %s132, %s135
    %p144 = scmp.eq.s32.totalorder %s18, 1
    %p145 = por %p143, %p144
    %p146 = scmp.ne.s32.totalorder %s135, %s136
    %p147 = scmp.eq.s32.totalorder %s18, 0
    %p148 = por %p146, %p147
    %p149 = scmp.ne.s32.totalorder %s135, %s136
    %p150 = scmp.eq.s32.totalorder %s19, 1
    %p151 = por %p149, %p150
    %p153 = scmp.ne.s32.totalorder %s136, %s152
    %p154 = scmp.eq.s32.totalorder %s19, 0
    %p155 = por %p153, %p154
    %s156 = ssub.s32 %s20, %s39
    %p157 = scmp.eq.s32.totalorder %s156, 0
    %s159 = sadd.s32 %s158, 1
    %s160 = scalar_select %p157, %s158, %s159
    %p163 = pneg %p157
    %p164 = scmp.eq.s32.totalorder %s13, 1
    %p165 = por %p163, %p164
    %p166 = scmp.ne.s32.totalorder %s158, %s161
    %p167 = scmp.eq.s32.totalorder %s13, 0
    %p168 = por %p166, %p167
    %p169 = scmp.ne.s32.totalorder %s158, %s161
    %p170 = scmp.eq.s32.totalorder %s18, 1
    %p171 = por %p169, %p170
    %p172 = scmp.ne.s32.totalorder %s161, %s162
    %p173 = scmp.eq.s32.totalorder %s18, 0
    %p174 = por %p172, %p173
    %p175 = scmp.ne.s32.totalorder %s161, %s162
    %p176 = scmp.eq.s32.totalorder %s19, 1
    %p177 = por %p175, %p176
    %p179 = scmp.ne.s32.totalorder %s162, %s178
    %p180 = scmp.eq.s32.totalorder %s19, 0
    %p181 = por %p179, %p180
    %s182 = ssub.s32 %s20, %s39
    %p183 = scmp.eq.s32.totalorder %s182, 0
    %s185 = sadd.s32 %s184, 1
    %s186 = scalar_select %p183, %s184, %s185
    %p189 = pneg %p183
    %p190 = scmp.eq.s32.totalorder %s13, 1
    %p191 = por %p189, %p190
    %p192 = scmp.ne.s32.totalorder %s184, %s187
    %p193 = scmp.eq.s32.totalorder %s13, 0
    %p194 = por %p192, %p193
    %p195 = scmp.ne.s32.totalorder %s184, %s187
    %p196 = scmp.eq.s32.totalorder %s18, 1
    %p197 = por %p195, %p196
    %p198 = scmp.ne.s32.totalorder %s187, %s188
    %p199 = scmp.eq.s32.totalorder %s18, 0
    %p200 = por %p198, %p199
    %p201 = scmp.ne.s32.totalorder %s187, %s188
    %p202 = scmp.eq.s32.totalorder %s19, 1
    %p203 = por %p201, %p202
    %p205 = scmp.ne.s32.totalorder %s188, %s204
    %p206 = scmp.eq.s32.totalorder %s19, 0
    %p207 = por %p205, %p206
    %s208 = ssub.s32 %s20, %s39
    %p209 = scmp.eq.s32.totalorder %s208, 0
    %s211 = sadd.s32 %s210, 1
    %s212 = scalar_select %p209, %s210, %s211
    %p215 = pneg %p209
    %p216 = scmp.eq.s32.totalorder %s13, 1
    %p217 = por %p215, %p216
    %p218 = scmp.ne.s32.totalorder %s210, %s213
    %p219 = scmp.eq.s32.totalorder %s13, 0
    %p220 = por %p218, %p219
    %p221 = scmp.ne.s32.totalorder %s210, %s213
    %p222 = scmp.eq.s32.totalorder %s18, 1
    %p223 = por %p221, %p222
    %p224 = scmp.ne.s32.totalorder %s213, %s214
    %p225 = scmp.eq.s32.totalorder %s18, 0
    %p226 = por %p224, %p225
    %p227 = scmp.ne.s32.totalorder %s213, %s214
    %p228 = scmp.eq.s32.totalorder %s19, 1
    %p229 = por %p227, %p228
    %p231 = scmp.ne.s32.totalorder %s214, %s230
    %p232 = scmp.eq.s32.totalorder %s19, 0
    %p233 = por %p231, %p232
    %p234 = scmp.le.s32.totalorder 1, %s13
    %p235 = scmp.lt.s32.totalorder %s13, 3
    %p236 = pnand %p234, %p235
    %p237 = pneg %p236
    // Predicated region
    $region9: #{tpu_custom_call.1} parent=5 // pred_check
      _
    $region10: #{tpu_custom_call.1} parent=5 // pred_check_branch
      %239 = sbr.rel (%p236) target = $region12
    $region11: #{tpu_custom_call.1} parent=5 // pred_region
      %s240 = ssub.s32 %s13, 1
    $region12: #{tpu_custom_call.1} parent=5 // pred_fallthru
      _
    %p241 = scmp.lt.s32.totalorder %s13, 2
    // Predicated region
    $region13: #{tpu_custom_call.1} parent=5 // pred_check
      %p242 = pneg %p241
    $region14: #{tpu_custom_call.1} parent=5 // pred_check_branch
      %244 = sbr.rel (%p242) target = $region16
    $region15: #{tpu_custom_call.1} parent=5 // pred_region
      // Predicated region
      $region17: #{tpu_custom_call.1} parent=15 // pred_check
        %p245 = pneg %p56
      $region18: #{tpu_custom_call.1} parent=15 // pred_check_branch
        %247 = sbr.rel (%p245) target = $region20
      $region19: #{tpu_custom_call.1} parent=15 // pred_region
        %s248 = sadd.s32 %s20, %s22
        %s249 = smul.u32 2, %s248
        %p250 = scmp.lt.s32.totalorder %s21, 1
        %s251 = scalar_select %p250, %s21, 1
        %p252 = scmp.lt.s32.totalorder %s249, 1
        %s253 = scalar_select %p252, %s249, 1
        %s254 = smul.addr %s251, 2
        %s255 = sadd.s32 %s253, %s254
        %s256 = smul.addr %s255, 8
        %s257 = scalar_lea.vmem %s0, %s256
        %s258 = sadd.s32 %s20, %s22
        %s259 = smul.u32 2, %s258
      $region20: #{tpu_custom_call.1} parent=15 // pred_fallthru
        _
      // Predicated region
      $region21: #{tpu_custom_call.1} parent=15 // pred_check
        %p260 = pneg %p86
      $region22: #{tpu_custom_call.1} parent=15 // pred_check_branch
        %262 = sbr.rel (%p260) target = $region24
      $region23: #{tpu_custom_call.1} parent=15 // pred_region
        %s263 = sadd.s32 %s20, %s22
        %s264 = smul.u32 2, %s263
        %p265 = scmp.lt.s32.totalorder %s21, 1
        %s266 = scalar_select %p265, %s21, 1
        %p267 = scmp.lt.s32.totalorder %s264, 1
        %s268 = scalar_select %p267, %s264, 1
        %s269 = smul.addr %s266, 2
        %s270 = sadd.s32 %s268, %s269
        %s271 = smul.addr %s270, 8
        %s272 = scalar_lea.vmem %s1, %s271
        %s273 = sadd.s32 %s20, %s22
        %s274 = smul.u32 2, %s273
      $region24: #{tpu_custom_call.1} parent=15 // pred_fallthru
        _
      // Predicated region
      $region25: #{tpu_custom_call.1} parent=15 // pred_check
        %p275 = pneg %p116
      $region26: #{tpu_custom_call.1} parent=15 // pred_check_branch
        %277 = sbr.rel (%p275) target = $region28
      $region27: #{tpu_custom_call.1} parent=15 // pred_region
        %s278 = sadd.s32 %s20, %s22
        %s279 = smul.u32 2, %s278
        %p280 = scmp.lt.s32.totalorder %s21, 1
        %s281 = scalar_select %p280, %s21, 1
        %p282 = scmp.lt.s32.totalorder %s279, 1
        %s283 = scalar_select %p282, %s279, 1
        %s284 = smul.addr %s281, 2
        %s285 = sadd.s32 %s283, %s284
        %s286 = scalar_lea.vmem %s2, %s285
        %s287 = sadd.s32 %s20, %s22
        %s288 = smul.u32 2, %s287
      $region28: #{tpu_custom_call.1} parent=15 // pred_fallthru
        _
    $region16: #{tpu_custom_call.1} parent=5 // pred_fallthru
      _
    %p289 = scmp.le.s32.totalorder 1, %s13
    %p290 = scmp.lt.s32.totalorder %s13, 3
    %p291 = pnand %p289, %p290
    %p292 = pneg %p291
    // Predicated region
    $region29: #{tpu_custom_call.1} parent=5 // pred_check
      _
    $region30: #{tpu_custom_call.1} parent=5 // pred_check_branch
      %294 = sbr.rel (%p291) target = $region32
    $region31: #{tpu_custom_call.1} parent=5 // pred_region
      %s295 = ssub.s32 %s13, 1
      %s296 = sadd.s32 %s23, %s25
      %s297 = smul.u32 2, %s296
      %p298 = scmp.lt.s32.totalorder %s24, 1
      %s299 = scalar_select %p298, %s24, 1
      %p300 = scmp.lt.s32.totalorder %s297, 1
      %s301 = scalar_select %p300, %s297, 1
      %s302 = smul.addr %s299, 2
      %s303 = sadd.s32 %s301, %s302
      %s304 = smul.addr %s303, 8
      %s305 = scalar_lea.vmem %s0, %s304
      %p306 = pneg %p62
      %p307 = pneg %p59
      %s308 = sadd.s32 %s23, %s25
      %s309 = smul.u32 2, %s308
      %p310 = scmp.lt.s32.totalorder %s24, 1
      %s311 = scalar_select %p310, %s24, 1
      %p312 = scmp.lt.s32.totalorder %s309, 1
      %s313 = scalar_select %p312, %s309, 1
      %s314 = smul.addr %s311, 2
      %s315 = sadd.s32 %s313, %s314
      %s316 = smul.addr %s315, 8
      %s317 = scalar_lea.vmem %s1, %s316
      %p318 = pneg %p92
      %p319 = pneg %p89
      %s320 = sadd.s32 %s23, %s25
      %s321 = smul.u32 2, %s320
      %p322 = scmp.lt.s32.totalorder %s24, 1
      %s323 = scalar_select %p322, %s24, 1
      %p324 = scmp.lt.s32.totalorder %s321, 1
      %s325 = scalar_select %p324, %s321, 1
      %s326 = smul.addr %s323, 2
      %s327 = sadd.s32 %s325, %s326
      %s328 = scalar_lea.vmem %s2, %s327
      %p329 = pneg %p122
      %p330 = pneg %p119
      %p331 = pneg %p148
      %p332 = pneg %p145
      %p333 = scmp.lt.s32.totalorder %s23, 0
      %s334 = scalar_select %p333, %s23, 0
      %s335 = smul.addr %s334, 2
      %s336 = smul.addr %s335, 8
      %s337 = scalar_lea.vmem %s3, %s336
      %p338 = pneg %p174
      %p339 = pneg %p171
      %p340 = scmp.lt.s32.totalorder %s23, 0
      %s341 = scalar_select %p340, %s23, 0
      %s342 = smul.addr %s341, 2
      %s343 = smul.addr %s342, 8
      %s344 = scalar_lea.vmem %s4, %s343
      %p345 = pneg %p200
      %p346 = pneg %p197
      %p347 = scmp.lt.s32.totalorder %s23, 0
      %s348 = scalar_select %p347, %s23, 0
      %s349 = smul.addr %s348, 2
      %s350 = smul.addr %s349, 8
      %s351 = scalar_lea.vmem %s5, %s350
      %p352 = pneg %p226
      %p353 = pneg %p223
      %p354 = scmp.lt.s32.totalorder %s23, 0
      %s355 = scalar_select %p354, %s23, 0
      %s356 = smul.addr %s355, 8
      %s357 = scalar_lea.vmem %s6, %s356
      %s358 = sadd.s32 %s23, %s25
      %s359 = smul.u32 2, %s358
      %p360 = scmp.lt.s32.totalorder %s24, 1
      %s361 = scalar_select %p360, %s24, 1
      %p362 = scmp.lt.s32.totalorder %s359, 1
      %s363 = scalar_select %p362, %s359, 1
      %s364 = smul.addr %s361, 2
      %s365 = sadd.s32 %s363, %s364
      %s366 = smul.addr %s365, 8
      %s367 = scalar_lea.vmem %s0, %s366
      %s368 = sadd.s32 %s23, %s25
      %s369 = smul.u32 2, %s368
      %s370 = sadd.s32 %s23, %s25
      %s371 = smul.u32 2, %s370
      %p372 = scmp.lt.s32.totalorder %s24, 1
      %s373 = scalar_select %p372, %s24, 1
      %p374 = scmp.lt.s32.totalorder %s371, 1
      %s375 = scalar_select %p374, %s371, 1
      %s376 = smul.addr %s373, 2
      %s377 = sadd.s32 %s375, %s376
      %s378 = smul.addr %s377, 8
      %s379 = scalar_lea.vmem %s1, %s378
      %s380 = sadd.s32 %s23, %s25
      %s381 = smul.u32 2, %s380
      %s382 = sadd.s32 %s23, %s25
      %s383 = smul.u32 2, %s382
      %p384 = scmp.lt.s32.totalorder %s24, 1
      %s385 = scalar_select %p384, %s24, 1
      %p386 = scmp.lt.s32.totalorder %s383, 1
      %s387 = scalar_select %p386, %s383, 1
      %s388 = smul.addr %s385, 2
      %s389 = sadd.s32 %s387, %s388
      %s390 = scalar_lea.vmem %s2, %s389
      %s391 = sadd.s32 %s23, %s25
      %s392 = smul.u32 2, %s391
      %p393 = scmp.lt.s32.totalorder %s23, 0
      %s394 = scalar_select %p393, %s23, 0
      %s395 = smul.addr %s394, 2
      %s396 = smul.addr %s395, 8
      %s397 = scalar_lea.vmem %s3, %s396
      %p398 = scmp.lt.s32.totalorder %s23, 0
      %s399 = scalar_select %p398, %s23, 0
      %s400 = smul.addr %s399, 2
      %s401 = smul.addr %s400, 8
      %s402 = scalar_lea.vmem %s4, %s401
      %p403 = scmp.lt.s32.totalorder %s23, 0
      %s404 = scalar_select %p403, %s23, 0
      %s405 = smul.addr %s404, 2
      %s406 = smul.addr %s405, 8
      %s407 = scalar_lea.vmem %s5, %s406
      %p408 = scmp.lt.s32.totalorder %s23, 0
      %s409 = scalar_select %p408, %s23, 0
      %s410 = smul.addr %s409, 8
      %s411 = scalar_lea.vmem %s6, %s410
      %p412 = scmp.eq.s32.totalorder %s24, 0
      %p413 = scmp.eq.s32.totalorder %s25, 0
      %p414 = pnand %p412, %p413
      %p415 = pneg %p414
      // Predicated region
      $region33: #{tpu_custom_call.1} parent=31 // pred_check
        _
      $region34: #{tpu_custom_call.1} parent=31 // pred_check_branch
        %417 = sbr.rel (%p414) target = $region36
      $region35: #{tpu_custom_call.1} parent=31 // pred_region
        %418 = vst [vmem:[%s397] sm:$0x7f] 0.0
        %419 = vst [vmem:[%s397 + $0x8] sm:$0x7f] 0.0
        %420 = vst [vmem:[%s402] sm:$0x7f] 0.0
        %421 = vst [vmem:[%s402 + $0x8] sm:$0x7f] 0.0
        %422 = vst [vmem:[%s407] sm:$0x7f] 0.0
        %423 = vst [vmem:[%s407 + $0x8] sm:$0x7f] 0.0
        %424 = vst [vmem:[%s411] sm:$0x7f] 0.0
      $region36: #{tpu_custom_call.1} parent=31 // pred_fallthru
        _
      %v425 = vld [vmem:[%s390] sm:$0x3]
      %s426 = sadd.s32 %s23, %s25
      %s427 = smul.u32 %s426, 256
      %v428 = vlaneseq
      %v429 = vand.u32 %v428, 127
      %v430 = vadd.s32 %v429, 128
      %v431 = vstv %s427
      %v432 = vadd.s32 %v431, %v429
      %v433 = vadd.s32 %v431, %v430
      %vm434 = vcmp.lt.s32.totalorder %v432, 256
      %vm435 = vcmp.lt.s32.totalorder %v433, 256
      %v436 = vlaneseq
      %v437 = vshrl.u32 %v436, 7
      %v438 = vlaneseq
      %v439 = vshrl.u32 %v438, 7
      %v440 = vsub.s32 0, %v439
      %v441 = vrot.slane %v425, %v440
      %v442 = vlaneseq
      %v443 = vshrl.u32 %v442, 7
      %v444 = vsub.s32 1, %v443
      %v445 = vrot.slane %v425, %v444
      %vm446 = vcmp.eq.s32.totalorder %v437, %v441
      %vm447 = vcmp.eq.s32.totalorder %v437, %v445
      %v448 = vsel %vm434, 1, 0
      %v449 = vsel %vm435, 1, 0
      %vm450 = vcmp.eq.s32.totalorder %v448, 1
      %vm451 = vcmp.eq.s32.totalorder %v449, 1
      %vm452 = vmand %vm446, %vm450
      %vm453 = vmand %vm447, %vm451
      %v454 = vsel %vm452, 1, 0
      %v455 = vsel %vm453, 1, 0
      %v456 = vcvt.s32.f32 %v454
      %v457 = vcvt.s32.f32 %v455
      %v458 = vld [vmem:[%s411] sm:$0x7f]
      %v459 = vadd.f32 %v456, %v457
      %v460 = vadd.f32 %v458, %v459
      %461 = vst [vmem:[%s411] sm:$0x7f] %v460
      %v462 = vld [vmem:[%s367] sm:$0x7f]
      %v463 = vld [vmem:[%s367 + $0x8] sm:$0x7f]
      %vm464 = vcmask 1046528
      %v465 = vsel %vm464, %v462, -inf
      %v466 = vrot.slane %v465, 4
      %v467 = vmax.f32 %v465, %v466
      %v468 = vrot.slane %v467, 2
      %v469 = vmax.f32 %v467, %v468
      %v470 = vrot.slane %v469, 1
      %v471 = vmax.f32 %v469, %v470
      %v472 = vsel %vm464, %v463, -inf
      %v473 = vrot.slane %v472, 4
      %v474 = vmax.f32 %v472, %v473
      %v475 = vrot.slane %v474, 2
      %v476 = vmax.f32 %v474, %v475
      %v477 = vrot.slane %v476, 1
      %v478 = vmax.f32 %v476, %v477
      %v479 = vsub.f32 %v462, %v471
      %v480 = vsub.f32 %v463, %v478
      %v481 = vmul.f32 %v479, 1.442695
      %v482 = vpow.pop %v481
      %v483 = vmul.f32 %v480, 1.442695
      %v484 = vpow.pop %v483
      %v485 = vsel %vm464, %v482, 0.0
      %v486 = vrot.slane %v485, 4
      %v487 = vadd.f32 %v485, %v486
      %v488 = vrot.slane %v487, 2
      %v489 = vadd.f32 %v487, %v488
      %v490 = vrot.slane %v489, 1
      %v491 = vadd.f32 %v489, %v490
      %v492 = vsel %vm464, %v484, 0.0
      %v493 = vrot.slane %v492, 4
      %v494 = vadd.f32 %v492, %v493
      %v495 = vrot.slane %v494, 2
      %v496 = vadd.f32 %v494, %v495
      %v497 = vrot.slane %v496, 1
      %v498 = vadd.f32 %v496, %v497
      %v499 = vrcp.pop %v491
      %v500 = vrcp.pop %v498
      %v501 = vmul.f32 %v482, %v499
      %v502 = vmul.f32 %v484, %v500
      %v503 = vsel %vm450, %v501, 0.0
      %v504 = vsel %vm451, %v502, 0.0
      %v505 = vmul.f32 %v503, %v456
      %v506 = vmul.f32 %v504, %v457
      %v507 = vsub.f32 0.0, %v471
      %v508 = vsub.f32 0.0, %v478
      %v509 = vmul.f32 %v507, 1.442695
      %v510 = vpow.pop %v509
      %v511 = vmul.f32 %v508, 1.442695
      %v512 = vpow.pop %v511
      %v513 = vadd.f32 %v510, %v482
      %v514 = vadd.f32 %v512, %v484
      %v515 = vlog2.pop %v513
      %v516 = vmul.f32 %v515, 0.6931472
      %v517 = vlog2.pop %v514
      %v518 = vmul.f32 %v517, 0.6931472
      %v519 = vadd.f32 %v471, %v516
      %v520 = vadd.f32 %v478, %v518
      %vm521 = vcmp.lt.f32.partialorder %v513, 1e-30
      %vm522 = vcmp.lt.f32.partialorder %v514, 1e-30
      %v523 = vmax.f32 %v462, 0.0
      %v524 = vmax.f32 %v463, 0.0
      %v525 = vsel %vm521, %v523, %v519
      %v526 = vsel %vm522, %v524, %v520
      %v527 = vmul.f32 %v462, %v456
      %v528 = vmul.f32 %v463, %v457
      %v529 = vsub.f32 %v525, %v527
      %v530 = vsub.f32 %v526, %v528
      %v531 = vsel %vm450, %v529, 0.0
      %v532 = vsel %vm451, %v530, 0.0
      %v533 = vld [vmem:[%s397] sm:$0x7f]
      %v534 = vadd.f32 %v505, %v506
      %v535 = vadd.f32 %v533, %v534
      %536 = vst [vmem:[%s397] sm:$0x7f] %v535
      %v537 = vld [vmem:[%s402] sm:$0x7f]
      %v538 = vadd.f32 %v503, %v504
      %v539 = vadd.f32 %v537, %v538
      %540 = vst [vmem:[%s402] sm:$0x7f] %v539
      %v541 = vld [vmem:[%s407] sm:$0x7f]
      %v542 = vadd.f32 %v531, %v532
      %v543 = vadd.f32 %v541, %v542
      %544 = vst [vmem:[%s407] sm:$0x7f] %v543
      %v545 = vld [vmem:[%s379] sm:$0x7f]
      %v546 = vld [vmem:[%s379 + $0x8] sm:$0x7f]
      %v547 = vsel %vm464, %v545, -inf
      %v548 = vrot.slane %v547, 4
      %v549 = vmax.f32 %v547, %v548
      %v550 = vrot.slane %v549, 2
      %v551 = vmax.f32 %v549, %v550
      %v552 = vrot.slane %v551, 1
      %v553 = vmax.f32 %v551, %v552
      %v554 = vsel %vm464, %v546, -inf
      %v555 = vrot.slane %v554, 4
      %v556 = vmax.f32 %v554, %v555
      %v557 = vrot.slane %v556, 2
      %v558 = vmax.f32 %v556, %v557
      %v559 = vrot.slane %v558, 1
      %v560 = vmax.f32 %v558, %v559
      %v561 = vsub.f32 %v545, %v553
      %v562 = vsub.f32 %v546, %v560
      %v563 = vmul.f32 %v561, 1.442695
      %v564 = vpow.pop %v563
      %v565 = vmul.f32 %v562, 1.442695
      %v566 = vpow.pop %v565
      %v567 = vsel %vm464, %v564, 0.0
      %v568 = vrot.slane %v567, 4
      %v569 = vadd.f32 %v567, %v568
      %v570 = vrot.slane %v569, 2
      %v571 = vadd.f32 %v569, %v570
      %v572 = vrot.slane %v571, 1
      %v573 = vadd.f32 %v571, %v572
      %v574 = vsel %vm464, %v566, 0.0
      %v575 = vrot.slane %v574, 4
      %v576 = vadd.f32 %v574, %v575
      %v577 = vrot.slane %v576, 2
      %v578 = vadd.f32 %v576, %v577
      %v579 = vrot.slane %v578, 1
      %v580 = vadd.f32 %v578, %v579
      %v581 = vrcp.pop %v573
      %v582 = vrcp.pop %v580
      %v583 = vmul.f32 %v564, %v581
      %v584 = vmul.f32 %v566, %v582
      %v585 = vsel %vm450, %v583, 0.0
      %v586 = vsel %vm451, %v584, 0.0
      %v587 = vmul.f32 %v585, %v456
      %v588 = vmul.f32 %v586, %v457
      %v589 = vsub.f32 0.0, %v553
      %v590 = vsub.f32 0.0, %v560
      %v591 = vmul.f32 %v589, 1.442695
      %v592 = vpow.pop %v591
      %v593 = vmul.f32 %v590, 1.442695
      %v594 = vpow.pop %v593
      %v595 = vadd.f32 %v592, %v564
      %v596 = vadd.f32 %v594, %v566
      %v597 = vlog2.pop %v595
      %v598 = vmul.f32 %v597, 0.6931472
      %v599 = vlog2.pop %v596
      %v600 = vmul.f32 %v599, 0.6931472
      %v601 = vadd.f32 %v553, %v598
      %v602 = vadd.f32 %v560, %v600
      %vm603 = vcmp.lt.f32.partialorder %v595, 1e-30
      %vm604 = vcmp.lt.f32.partialorder %v596, 1e-30
      %v605 = vmax.f32 %v545, 0.0
      %v606 = vmax.f32 %v546, 0.0
      %v607 = vsel %vm603, %v605, %v601
      %v608 = vsel %vm604, %v606, %v602
      %v609 = vmul.f32 %v545, %v456
      %v610 = vmul.f32 %v546, %v457
      %v611 = vsub.f32 %v607, %v609
      %v612 = vsub.f32 %v608, %v610
      %v613 = vsel %vm450, %v611, 0.0
      %v614 = vsel %vm451, %v612, 0.0
      %s615 = scalar_lea.vmem %s397, 8
      %v616 = vld [vmem:[%s615] sm:$0x7f]
      %v617 = vadd.f32 %v587, %v588
      %v618 = vadd.f32 %v616, %v617
      %619 = vst [vmem:[%s615] sm:$0x7f] %v618
      %s620 = scalar_lea.vmem %s402, 8
      %v621 = vld [vmem:[%s620] sm:$0x7f]
      %v622 = vadd.f32 %v585, %v586
      %v623 = vadd.f32 %v621, %v622
      %624 = vst [vmem:[%s620] sm:$0x7f] %v623
      %s625 = scalar_lea.vmem %s407, 8
      %v626 = vld [vmem:[%s625] sm:$0x7f]
      %v627 = vadd.f32 %v613, %v614
      %v628 = vadd.f32 %v626, %v627
      %629 = vst [vmem:[%s625] sm:$0x7f] %v628
      %p630 = scmp.lt.s32.totalorder %s23, 0
      %s631 = scalar_select %p630, %s23, 0
      %s632 = smul.addr %s631, 2
      %s633 = smul.addr %s632, 8
      %s634 = scalar_lea.vmem %s3, %s633
      %p635 = scmp.lt.s32.totalorder %s23, 0
      %s636 = scalar_select %p635, %s23, 0
      %s637 = smul.addr %s636, 2
      %s638 = smul.addr %s637, 8
      %s639 = scalar_lea.vmem %s4, %s638
      %p640 = scmp.lt.s32.totalorder %s23, 0
      %s641 = scalar_select %p640, %s23, 0
      %s642 = smul.addr %s641, 2
      %s643 = smul.addr %s642, 8
      %s644 = scalar_lea.vmem %s5, %s643
      %p645 = scmp.lt.s32.totalorder %s23, 0
      %s646 = scalar_select %p645, %s23, 0
      %s647 = smul.addr %s646, 8
      %s648 = scalar_lea.vmem %s6, %s647
      // Predicated region
      $region37: #{tpu_custom_call.1} parent=31 // pred_check
        %p649 = pneg %p145
      $region38: #{tpu_custom_call.1} parent=31 // pred_check_branch
        %651 = sbr.rel (%p649) target = $region40
      $region39: #{tpu_custom_call.1} parent=31 // pred_region
        _
      $region40: #{tpu_custom_call.1} parent=31 // pred_fallthru
        _
      // Predicated region
      $region41: #{tpu_custom_call.1} parent=31 // pred_check
        %p652 = pneg %p171
      $region42: #{tpu_custom_call.1} parent=31 // pred_check_branch
        %654 = sbr.rel (%p652) target = $region44
      $region43: #{tpu_custom_call.1} parent=31 // pred_region
        _
      $region44: #{tpu_custom_call.1} parent=31 // pred_fallthru
        _
      // Predicated region
      $region45: #{tpu_custom_call.1} parent=31 // pred_check
        %p655 = pneg %p197
      $region46: #{tpu_custom_call.1} parent=31 // pred_check_branch
        %657 = sbr.rel (%p655) target = $region48
      $region47: #{tpu_custom_call.1} parent=31 // pred_region
        _
      $region48: #{tpu_custom_call.1} parent=31 // pred_fallthru
        _
      // Predicated region
      $region49: #{tpu_custom_call.1} parent=31 // pred_check
        %p658 = pneg %p223
      $region50: #{tpu_custom_call.1} parent=31 // pred_check_branch
        %660 = sbr.rel (%p658) target = $region52
      $region51: #{tpu_custom_call.1} parent=31 // pred_region
        _
      $region52: #{tpu_custom_call.1} parent=31 // pred_fallthru
        _
      // Predicated region
      $region53: #{tpu_custom_call.1} parent=31 // pred_check
        %p661 = pneg %p145
      $region54: #{tpu_custom_call.1} parent=31 // pred_check_branch
        %663 = sbr.rel (%p661) target = $region56
      $region55: #{tpu_custom_call.1} parent=31 // pred_region
        %p664 = scmp.lt.s32.totalorder %s23, 0
        %s665 = scalar_select %p664, %s23, 0
        %s666 = smul.addr %s665, 2
        %s667 = smul.addr %s666, 8
        %s668 = scalar_lea.vmem %s3, %s667
      $region56: #{tpu_custom_call.1} parent=31 // pred_fallthru
        _
      // Predicated region
      $region57: #{tpu_custom_call.1} parent=31 // pred_check
        %p669 = pneg %p171
      $region58: #{tpu_custom_call.1} parent=31 // pred_check_branch
        %671 = sbr.rel (%p669) target = $region60
      $region59: #{tpu_custom_call.1} parent=31 // pred_region
        %p672 = scmp.lt.s32.totalorder %s23, 0
        %s673 = scalar_select %p672, %s23, 0
        %s674 = smul.addr %s673, 2
        %s675 = smul.addr %s674, 8
        %s676 = scalar_lea.vmem %s4, %s675
      $region60: #{tpu_custom_call.1} parent=31 // pred_fallthru
        _
      // Predicated region
      $region61: #{tpu_custom_call.1} parent=31 // pred_check
        %p677 = pneg %p197
      $region62: #{tpu_custom_call.1} parent=31 // pred_check_branch
        %679 = sbr.rel (%p677) target = $region64
      $region63: #{tpu_custom_call.1} parent=31 // pred_region
        %p680 = scmp.lt.s32.totalorder %s23, 0
        %s681 = scalar_select %p680, %s23, 0
        %s682 = smul.addr %s681, 2
        %s683 = smul.addr %s682, 8
        %s684 = scalar_lea.vmem %s5, %s683
      $region64: #{tpu_custom_call.1} parent=31 // pred_fallthru
        _
      // Predicated region
      $region65: #{tpu_custom_call.1} parent=31 // pred_check
        %p685 = pneg %p223
      $region66: #{tpu_custom_call.1} parent=31 // pred_check_branch
        %687 = sbr.rel (%p685) target = $region68
      $region67: #{tpu_custom_call.1} parent=31 // pred_region
        %p688 = scmp.lt.s32.totalorder %s23, 0
        %s689 = scalar_select %p688, %s23, 0
        %s690 = smul.addr %s689, 8
        %s691 = scalar_lea.vmem %s6, %s690
      $region68: #{tpu_custom_call.1} parent=31 // pred_fallthru
        _
    $region32: #{tpu_custom_call.1} parent=5 // pred_fallthru
      _
    %p692 = scmp.le.s32.totalorder 2, %s13
    // Predicated region
    $region69: #{tpu_custom_call.1} parent=5 // pred_check
      %p693 = pneg %p692
    $region70: #{tpu_custom_call.1} parent=5 // pred_check_branch
      %695 = sbr.rel (%p693) target = $region72
    $region71: #{tpu_custom_call.1} parent=5 // pred_region
      %s696 = ssub.s32 %s13, 2
    $region72: #{tpu_custom_call.1} parent=5 // pred_fallthru
      _
  $region6: #{tpu_custom_call.1} parent=0 // loop_footer
    %s17 = sadd.s32 1, %s13
  $region7: #{tpu_custom_call.1} parent=0 // loop_footer_branch
    %12 = sbr.rel target = $region3
  $region8: #{tpu_custom_call.1} parent=0 // loop_exit
    _

</llo_original>
